<compile_context>
chip_gen: v7x
topology: tpu7x:2x2x1
jax: 0.10.0
libtpu: 0.0.40
codegen_flags: <defaults>
</compile_context>

<pallas_src>
import math

import jax
import jax.numpy as jnp
from jax.experimental import pallas as pl
from jax.experimental.pallas import tpu as pltpu


# ---------------------------------------------------------------------------
# "Init-time" buffer construction (exact port of get_fixed_sin_cos_encodings)
# ---------------------------------------------------------------------------
def get_fixed_sin_cos_encodings(d_model: int, max_len: int) -> jnp.ndarray:
    """Sin-cos fixed positional encodings, identical to the torch version."""
    assert d_model % 2 == 0
    position = jnp.arange(max_len, dtype=jnp.float32)[:, None]          # (L, 1)
    div_term = jnp.exp(
        jnp.arange(0, d_model, 2, dtype=jnp.float32)
        * (-math.log(10000.0) / d_model)
    )                                                                    # (D/2,)
    angles = position * div_term                                         # (L, D/2)
    pe = jnp.zeros((max_len, d_model), jnp.float32)
    pe = pe.at[:, 0::2].set(jnp.sin(angles))
    pe = pe.at[:, 1::2].set(jnp.cos(angles))
    return pe


# ---------------------------------------------------------------------------
# Kernel: replicate the resident PE tile across the batch rows of this block.
#   pe_ref : (TR, 128)      or (S, D)       -- sublane/lane-dense PE tile
#   out_ref: (TB, TR, 128)  or (TB, S, D)   -- output block (batch tile)
# ---------------------------------------------------------------------------
def pe_repeat_kernel(pe_ref, out_ref):
    out_ref[...] = jnp.broadcast_to(pe_ref[...][None], out_ref.shape)


# ---------------------------------------------------------------------------
# Forward: pe.unsqueeze(0).repeat(B, 1, 1)[:, :actual_len, :]
# ---------------------------------------------------------------------------
def absolute_positional_encoding_forward(
    x: jnp.ndarray,
    pe: jnp.ndarray,
    *,
    force_pallas: bool = False,
    target_block_bytes: int = 4 * 1024 * 1024,   # ~4 MiB blocks: past the ~85%
                                                 # HBM-roofline knee, safe on
                                                 # v5e/v6e/v7x VMEM budgets.
    min_pallas_bytes: int = 1 << 20,
) -> jnp.ndarray:
    batch_size = x.shape[0]
    actual_len = x.shape[1]
    max_len, d_model = pe.shape
    assert actual_len <= max_len

    pe_s = pe[:actual_len]                       # cheap slice of the tiny buffer
    itemsize = pe.dtype.itemsize
    sd = actual_len * d_model
    out_bytes = batch_size * sd * itemsize
    pe_bytes = sd * itemsize

    # Tiny outputs: let XLA broadcast (fuses with the consumer; no HBM dup).
    if not force_pallas and out_bytes < min_pallas_bytes:
        return jnp.broadcast_to(pe_s[None], (batch_size, actual_len, d_model))

    LANE = 128
    SUB = 8
    cost = pl.CostEstimate(flops=0, transcendentals=0,
                           bytes_accessed=out_bytes + pe_bytes)

    if sd % LANE == 0:
        # --- Lane-dense path: view (S, D) plane as (R, 128) rows (free). ---
        R = sd // LANE
        pe_slab = pe_s.reshape(R, LANE)          # sublane+lane dense, no padding
        row_bytes = sd * itemsize                # bytes per batch row
        if row_bytes <= target_block_bytes:
            tr = R
            tb = max(1, min(batch_size, target_block_bytes // row_bytes))
        else:                                    # huge S*D: tile the plane too
            tb = 1
            tr = min(R, max(SUB,
                            (target_block_bytes // (LANE * itemsize)) // SUB * SUB))

        grid = (pl.cdiv(R, tr), pl.cdiv(batch_size, tb))   # batch innermost:
        out_slab = pl.pallas_call(                          # pe DMA'd once per r
            pe_repeat_kernel,
            out_shape=jax.ShapeDtypeStruct((batch_size, R, LANE), pe.dtype),
            grid=grid,
            in_specs=[pl.BlockSpec((tr, LANE), lambda r, b: (r, 0))],
            out_specs=pl.BlockSpec((tb, tr, LANE), lambda r, b: (b, r, 0)),
            compiler_params=pltpu.CompilerParams(
                dimension_semantics=("parallel", "parallel")),
            cost_estimate=cost,
        )(pe_slab)
        return out_slab.reshape(batch_size, actual_len, d_model)

    # --- Fallback: S*D not 128-aligned; full (S, D) plane per block. ---
    # TODO(synk): could pad the lane dim to 128 for unmasked stores, at the cost
    # of extra HBM traffic + a wrapper-side slice; not worth it for this op.
    row_bytes = max(sd * itemsize, 1)
    tb = max(1, min(batch_size, target_block_bytes // row_bytes))
    grid = (pl.cdiv(batch_size, tb),)
    return pl.pallas_call(
        pe_repeat_kernel,
        out_shape=jax.ShapeDtypeStruct((batch_size, actual_len, d_model), pe.dtype),
        grid=grid,
        in_specs=[pl.BlockSpec((actual_len, d_model), lambda i: (0, 0))],
        out_specs=pl.BlockSpec((tb, actual_len, d_model), lambda i: (i, 0, 0)),
        compiler_params=pltpu.CompilerParams(
            dimension_semantics=("parallel",)),
        cost_estimate=cost,
    )(pe_s)


# TODO(synk): trainable=True path uses an nn.Embedding weight instead of the
# fixed buffer; the forward is the identical broadcast (pass the weight as
# `pe`).  get_pe(position) is a plain row lookup and needs no kernel.


# ---------------------------------------------------------------------------
# Example / self-test
# ---------------------------------------------------------------------------
if __name__ == "__main__":
    key = jax.random.PRNGKey(0)

    # Case 1: lane-dense path (S*D % 128 == 0), single block.
    max_len, d_model, batch_size, actual_len = 16, 32, 2, 8
    x = jax.random.normal(key, (batch_size, actual_len, d_model), jnp.float32)
    pe = get_fixed_sin_cos_encodings(d_model, max_len)   # "register_buffer"
    out = jax.block_until_ready(
        absolute_positional_encoding_forward(x, pe, force_pallas=True))
    ref = jnp.broadcast_to(pe[None, :actual_len], (batch_size, actual_len, d_model))
    assert out.shape == ref.shape
    assert bool(jnp.array_equal(out, ref))
    assert bool(jnp.all(jnp.isfinite(out)))

    # Case 2: multi-step batch-tiled grid (tiny block budget forces tiling).
    b2 = 8
    x2 = jax.random.normal(key, (b2, actual_len, d_model), jnp.float32)
    out2 = jax.block_until_ready(
        absolute_positional_encoding_forward(
            x2, pe, force_pallas=True, target_block_bytes=1024))
    ref2 = jnp.broadcast_to(pe[None, :actual_len], (b2, actual_len, d_model))
    assert bool(jnp.array_equal(out2, ref2))

    # Case 3: non-128-aligned fallback path.
    d3, s3, b3 = 12, 5, 3
    pe3 = get_fixed_sin_cos_encodings(d3, max_len)
    x3 = jax.random.normal(key, (b3, s3, d3), jnp.float32)
    out3 = jax.block_until_ready(
        absolute_positional_encoding_forward(x3, pe3, force_pallas=True))
    ref3 = jnp.broadcast_to(pe3[None, :s3], (b3, s3, d3))
    assert bool(jnp.array_equal(out3, ref3))

    # Case 4: tiny-output shortcut (no Pallas call, default path).
    out4 = jax.block_until_ready(absolute_positional_encoding_forward(x, pe))
    assert bool(jnp.array_equal(out4, ref))

    print("KERNEL_OK")
</pallas_src>

<mosaic_0001>
module attributes {stable_mosaic.version = 11 : i64} {
  func.func @pe_repeat_kernel(%arg0: i32, %arg1: i32, %arg2: memref<2x128xf32, #tpu.memory_space<vmem>>, %arg3: memref<2x2x128xf32, #tpu.memory_space<vmem>>) attributes {dimension_semantics = [#tpu.dimension_semantics<parallel>, #tpu.dimension_semantics<parallel>], iteration_bounds = array<i64: 1, 1>, scalar_prefetch = 0 : i64, scratch_operands = 0 : i64, tpu.core_type = #tpu.core_type<tc>, window_params = [{transform_indices = @transform_0, window_bounds = array<i64: 2, 128>}, {transform_indices = @transform_1, window_bounds = array<i64: 2, 2, 128>}]} {
    %c0 = arith.constant 0 : index
    %c0_0 = arith.constant 0 : index
    %0 = vector.load %arg2[%c0, %c0_0] : memref<2x128xf32, #tpu.memory_space<vmem>>, vector<2x128xf32>
    %1 = vector.shape_cast %0 : vector<2x128xf32> to vector<1x2x128xf32>
    %2 = vector.shape_cast %1 : vector<1x2x128xf32> to vector<1x2x128xf32>
    %3 = vector.broadcast %2 : vector<1x2x128xf32> to vector<2x2x128xf32>
    %c0_1 = arith.constant 0 : index
    %c0_2 = arith.constant 0 : index
    %c0_3 = arith.constant 0 : index
    %4 = vector.load %arg3[%c0_1, %c0_2, %c0_3] : memref<2x2x128xf32, #tpu.memory_space<vmem>>, vector<2x2x128xf32>
    tpu.vector_store %arg3[%c0_1, %c0_2, %c0_3], %3 {strides = array<i32>} : memref<2x2x128xf32, #tpu.memory_space<vmem>>, vector<2x2x128xf32>,
    return
  }
  func.func @transform_0(%arg0: i32, %arg1: i32) -> (i32, i32) {
    %c0_i32 = arith.constant 0 : i32
    %c0_i32_0 = arith.constant 0 : i32
    return %arg0, %c0_i32 : i32, i32
  }
  func.func @transform_1(%arg0: i32, %arg1: i32) -> (i32, i32, i32) {
    %c0_i32 = arith.constant 0 : i32
    %c0_i32_0 = arith.constant 0 : i32
    return %arg1, %arg0, %c0_i32 : i32, i32, i32
  }
}

</mosaic_0001>

<llo_original>
// kernel: tpu_custom_call.1
$region0: #{tpu_custom_call.1}
  #allocation0 [shape = 'u32[]', space=smem, size = 0x4, offset = 0x4, fixed_abs, tag = 'smem constant byte address 0x4 - core index']
  #allocation1 [shape = 'u32[144,128]{1,0:T(1,128)}', space=vmem, size = 0x12000, scoped, tag = 'internal scratch']
  %s0 = inlined_call_operand.hbm [shape: f32[2,128], index: 0, kind: input, shape index: {}]
  %s1 = inlined_call_operand.hbm [shape: f32[2,2,128], index: 1, kind: output, shape index: {}]
  %s2 = sld [smem:[#allocation0]]
  $region18: #{tpu_custom_call.1} parent=0
    _
  %s4 = ssub.s32 1, %s2
  %s5 = scalar_select 0, %s4, %s2
  $region1: #{tpu_custom_call.1} parent=0
    #allocation2 [shape = 'u8[1024]{0}', space=vmem, size = 0x400, scoped, tag = 'input window, operand 0, single buffered']
    #allocation3 [shape = 's32[1]{0}', space=sflag, size = 0x4, scoped, tag = 'scoped memory for tpu_custom_call.1']
    #allocation4 [shape = 's32[1]{0}', space=sflag, size = 0x4, scoped, tag = 'scoped memory for tpu_custom_call.1']
    #allocation5 [shape = 'u8[2048]{0}', space=vmem, size = 0x800, scoped, tag = 'output window, operand 0, single buffered']
    %6 = vsyncpa [#allocation3], 0
    %7 = vsyncpa [#allocation4], 0
    // Predicated region
    $region2: #{tpu_custom_call.1} parent=1 // pred_check
      _
    $region3: #{tpu_custom_call.1} parent=1 // pred_check_branch
      %9 = sbr.rel (0) target = $region5
    $region4: #{tpu_custom_call.1} parent=1 // pred_region
      %s11 = ssub.s32 32, 32
      %12 = vsyncadd [#allocation3], %s11
      %s14 = sshll.u32 [#allocation2], 4
      %s15 = int_to_ptr.vmem [resolvable:$true] %s14
      %17 = dma.hbm_to_vmem [thread:$0]  %s0, 32, %s15, [#allocation3]
    $region5: #{tpu_custom_call.1} parent=1 // pred_fallthru
      _
    // Predicated region
    $region6: #{tpu_custom_call.1} parent=1 // pred_check
      _
    $region7: #{tpu_custom_call.1} parent=1 // pred_check_branch
      %19 = sbr.rel (0) target = $region9
    $region8: #{tpu_custom_call.1} parent=1 // pred_region
      %20 = dma.done [#allocation3], 32
    $region9: #{tpu_custom_call.1} parent=1 // pred_fallthru
      _
    %v21 = vld [vmem:[#allocation2] sm:$0x3]
    %22 = vst [vmem:[#allocation5] sm:$0x3] %v21
    %23 = vst [vmem:[#allocation5 + $0x2] sm:$0x3] %v21
    // Predicated region
    $region10: #{tpu_custom_call.1} parent=1 // pred_check
      _
    $region11: #{tpu_custom_call.1} parent=1 // pred_check_branch
      %25 = sbr.rel (0) target = $region13
    $region12: #{tpu_custom_call.1} parent=1 // pred_region
      %s27 = ssub.s32 64, 64
      %28 = vsyncadd [#allocation4], %s27
      %s29 = sshll.u32 [#allocation5], 4
      %s30 = int_to_ptr.vmem [resolvable:$true] %s29
      %35 = dma.vmem_to_hbm [thread:$0]  %s30, 64, %s1, [#allocation4], 32, 32, 2
    $region13: #{tpu_custom_call.1} parent=1 // pred_fallthru
      _
    // Predicated region
    $region14: #{tpu_custom_call.1} parent=1 // pred_check
      _
    $region15: #{tpu_custom_call.1} parent=1 // pred_check_branch
      %37 = sbr.rel (0) target = $region17
    $region16: #{tpu_custom_call.1} parent=1 // pred_region
      %38 = dma.done [#allocation4], 64
    $region17: #{tpu_custom_call.1} parent=1 // pred_fallthru
      _
    %39 = vsyncpa [#allocation3], 1
    %40 = vsyncpa [#allocation4], 1

</llo_original>
